<compile_context>
chip_gen: v7x
topology: tpu7x:2x2x1
jax: 0.10.0
libtpu: 0.0.40
codegen_flags: <defaults>
</compile_context>

<pallas_src>
import jax
import jax.numpy as jnp
from jax.experimental import pallas as pl
from jax.experimental.pallas import tpu as pltpu


def _round_up(x, m):
    return ((x + m - 1) // m) * m


def _choose_tiling(B, max_tile=8192):
    """Pick (tile_b, b_pad) with tile_b | b_pad, both multiples of 128."""
    if B <= max_tile:
        b_pad = _round_up(B, 128)
        # Split into 2 steps when alignment allows so both v7x TCs get work.
        if b_pad >= 2048 and b_pad % 2048 == 0:
            return b_pad // 2, b_pad
        return b_pad, b_pad          # single step; block == full array dims
    # Large batches: 1024-row units keep multi-step blocks (8,128)-aligned.
    b_pad = _round_up(B, 1024)
    n_units = b_pad // 1024
    units = max(u for u in range(1, max_tile // 1024 + 1) if n_units % u == 0)
    if units < 4:
        # Only tiny exact divisors exist; pad slightly further for big tiles.
        units = max_tile // 1024
        b_pad = _round_up(B, units * 1024)
    return units * 1024, b_pad


def mlp_kernel(x_ref, w1_ref, b1_ref, w2_ref, b2_ref, o_ref):
    # proj1 on the MXU, f32 accumulation (matches torch.nn.Linear numerics).
    h = jnp.dot(x_ref[...], w1_ref[...], preferred_element_type=jnp.float32)
    # Bias + ReLU on the VPU.
    h = jnp.maximum(h + b1_ref[...], 0.0)
    # proj2: broadcast-mul + lane reduction (VPU/XLU slack is free under the
    # dominant x DMA); the scalar b2 comes from SMEM.
    o = jnp.sum(h * w2_ref[...], axis=-1) + b2_ref[0, 0]        # (tile_b,)
    # Lane-dense store: (tile_b,) -> (tile_b // 128, 128) output slab.
    o_ref[...] = o.reshape(o_ref.shape).astype(o_ref.dtype)


@jax.jit
def mlp_forward(x, w1, b1, w2, b2):
    B, d_in = x.shape
    d_hid = w1.shape[1]

    tile_b, b_pad = _choose_tiling(B)
    if b_pad != B:
        x = jnp.pad(x, ((0, b_pad - B), (0, 0)))

    w1_f = w1.astype(jnp.float32)
    b1_row = b1.reshape(1, d_hid).astype(jnp.float32)
    w2_row = w2.reshape(1, d_hid).astype(jnp.float32)   # (64,1) -> (1,64)
    b2_s = b2.reshape(1, 1).astype(jnp.float32)

    grid = (b_pad // tile_b,)

    out = pl.pallas_call(
        mlp_kernel,
        out_shape=jax.ShapeDtypeStruct((b_pad // 128, 128), jnp.float32),
        grid=grid,
        in_specs=[
            pl.BlockSpec((tile_b, d_in), lambda i: (i, 0)),     # x: streamed per step
            pl.BlockSpec((d_in, d_hid), lambda i: (0, 0)),      # w1: VMEM-resident
            pl.BlockSpec((1, d_hid), lambda i: (0, 0)),         # b1: VMEM-resident
            pl.BlockSpec((1, d_hid), lambda i: (0, 0)),         # w2 row: VMEM-resident
            pl.BlockSpec(memory_space=pltpu.MemorySpace.SMEM),  # b2 scalar in SMEM
        ],
        out_specs=pl.BlockSpec((tile_b // 128, 128), lambda i: (i, 0)),
        compiler_params=pltpu.CompilerParams(
            dimension_semantics=("parallel",),
        ),
    )(x, w1_f, b1_row, w2_row, b2_s)

    out = out.reshape(b_pad, 1)
    return out[:B] if b_pad != B else out


if __name__ == "__main__":
    key = jax.random.PRNGKey(0)
    k_x, k_w1, k_b1, k_w2, k_b2 = jax.random.split(key, 5)

    B, D_IN, D_HID, D_OUT = 8, 128, 64, 1

    # Mimic PyTorch Linear init: uniform(-1/sqrt(fan_in), 1/sqrt(fan_in)).
    lim1 = 1.0 / jnp.sqrt(D_IN)
    lim2 = 1.0 / jnp.sqrt(D_HID)
    w1 = jax.random.uniform(k_w1, (D_IN, D_HID), jnp.float32, -lim1, lim1)
    b1 = jax.random.uniform(k_b1, (D_HID,), jnp.float32, -lim1, lim1)
    w2 = jax.random.uniform(k_w2, (D_HID, D_OUT), jnp.float32, -lim2, lim2)
    b2 = jax.random.uniform(k_b2, (D_OUT,), jnp.float32, -lim2, lim2)

    x = jax.random.normal(k_x, (B, D_IN), jnp.float32)

    out = jax.block_until_ready(mlp_forward(x, w1, b1, w2, b2))

    # Pure-f32 reference (same math as the PyTorch module).
    h_ref = jnp.maximum(
        jnp.dot(x, w1, precision=jax.lax.Precision.HIGHEST) + b1, 0.0)
    ref = jnp.dot(h_ref, w2, precision=jax.lax.Precision.HIGHEST) + b2

    assert out.shape == (B, D_OUT), out.shape
    err = float(jnp.max(jnp.abs(out - ref)))
    assert jnp.allclose(out, ref, atol=1e-3, rtol=1e-3), err

    print("KERNEL_OK")
</pallas_src>

<mosaic_0001>
module attributes {stable_mosaic.version = 11 : i64} {
  func.func @mlp_kernel(%arg0: i32, %arg1: memref<128x128xf32, #tpu.memory_space<vmem>>, %arg2: memref<128x64xf32, #tpu.memory_space<vmem>>, %arg3: memref<1x64xf32, #tpu.memory_space<vmem>>, %arg4: memref<1x64xf32, #tpu.memory_space<vmem>>, %arg5: memref<1x1xf32, #tpu.memory_space<smem>>, %arg6: memref<1x128xf32, #tpu.memory_space<vmem>>) attributes {dimension_semantics = [#tpu.dimension_semantics<parallel>], iteration_bounds = array<i64: 1>, scalar_prefetch = 0 : i64, scratch_operands = 0 : i64, tpu.core_type = #tpu.core_type<tc>, window_params = [{transform_indices = @transform_0, window_bounds = array<i64: 128, 128>}, {pipeline_mode = #tpu.pipeline_mode<synchronous>, transform_indices = @transform_1, window_bounds = array<i64: 128, 64>}, {pipeline_mode = #tpu.pipeline_mode<synchronous>, transform_indices = @transform_2, window_bounds = array<i64: 1, 64>}, {pipeline_mode = #tpu.pipeline_mode<synchronous>, transform_indices = @transform_3, window_bounds = array<i64: 1, 64>}, {transform_indices = @transform_4, window_bounds = array<i64: 1, 1>}, {transform_indices = @transform_5, window_bounds = array<i64: 1, 128>}]} {
    %c0 = arith.constant 0 : index
    %c0_0 = arith.constant 0 : index
    %0 = vector.load %arg1[%c0, %c0_0] : memref<128x128xf32, #tpu.memory_space<vmem>>, vector<128x128xf32>
    %c0_1 = arith.constant 0 : index
    %c0_2 = arith.constant 0 : index
    %1 = vector.load %arg2[%c0_1, %c0_2] : memref<128x64xf32, #tpu.memory_space<vmem>>, vector<128x64xf32>
    %cst = arith.constant dense<0.000000e+00> : vector<128x64xf32>
    %2 = tpu.matmul %0, %1, %cst {dimension_numbers = #tpu.dot_dimension_numbers<[1], [0], [0], [1], [0, 0, 1, 1], [], []>} : vector<128x128xf32>, vector<128x64xf32>, vector<128x64xf32> -> vector<128x64xf32>
    %c0_3 = arith.constant 0 : index
    %c0_4 = arith.constant 0 : index
    %3 = vector.load %arg3[%c0_3, %c0_4] : memref<1x64xf32, #tpu.memory_space<vmem>>, vector<1x64xf32>
    %4 = vector.broadcast %3 : vector<1x64xf32> to vector<128x64xf32>
    %5 = arith.addf %2, %4 : vector<128x64xf32>
    %cst_5 = arith.constant 0.000000e+00 : f32
    %6 = vector.broadcast %cst_5 : f32 to vector<128x64xf32>
    %7 = arith.maximumf %5, %6 : vector<128x64xf32>
    %c0_6 = arith.constant 0 : index
    %c0_7 = arith.constant 0 : index
    %8 = vector.load %arg4[%c0_6, %c0_7] : memref<1x64xf32, #tpu.memory_space<vmem>>, vector<1x64xf32>
    %9 = vector.broadcast %8 : vector<1x64xf32> to vector<128x64xf32>
    %10 = arith.mulf %7, %9 : vector<128x64xf32>
    %cst_8 = arith.constant dense<0.000000e+00> : vector<128xf32>
    %11 = vector.multi_reduction <add>, %10, %cst_8 [1] : vector<128x64xf32> to vector<128xf32>
    %c0_9 = arith.constant 0 : index
    %c0_10 = arith.constant 0 : index
    %12 = memref.load %arg5[%c0_9, %c0_10] : memref<1x1xf32, #tpu.memory_space<smem>>
    %13 = vector.broadcast %12 : f32 to vector<128xf32>
    %14 = arith.addf %11, %13 : vector<128xf32>
    %15 = vector.shape_cast %14 : vector<128xf32> to vector<1x128xf32>
    %c0_11 = arith.constant 0 : index
    %c0_12 = arith.constant 0 : index
    %16 = vector.load %arg6[%c0_11, %c0_12] : memref<1x128xf32, #tpu.memory_space<vmem>>, vector<1x128xf32>
    tpu.vector_store %arg6[%c0_11, %c0_12], %15 {strides = array<i32>} : memref<1x128xf32, #tpu.memory_space<vmem>>, vector<1x128xf32>,
    return
  }
  func.func @transform_0(%arg0: i32) -> (i32, i32) {
    %c0_i32 = arith.constant 0 : i32
    %c0_i32_0 = arith.constant 0 : i32
    return %arg0, %c0_i32 : i32, i32
  }
  func.func @transform_1(%arg0: i32) -> (i32, i32) {
    %c0_i32 = arith.constant 0 : i32
    %c0_i32_0 = arith.constant 0 : i32
    %c0_i32_1 = arith.constant 0 : i32
    return %c0_i32, %c0_i32_0 : i32, i32
  }
  func.func @transform_2(%arg0: i32) -> (i32, i32) {
    %c0_i32 = arith.constant 0 : i32
    %c0_i32_0 = arith.constant 0 : i32
    %c0_i32_1 = arith.constant 0 : i32
    return %c0_i32, %c0_i32_0 : i32, i32
  }
  func.func @transform_3(%arg0: i32) -> (i32, i32) {
    %c0_i32 = arith.constant 0 : i32
    %c0_i32_0 = arith.constant 0 : i32
    %c0_i32_1 = arith.constant 0 : i32
    return %c0_i32, %c0_i32_0 : i32, i32
  }
  func.func @transform_4(%arg0: i32) -> (i32, i32) {
    %c0_i32 = arith.constant 0 : i32
    %c0_i32_0 = arith.constant 0 : i32
    %c0_i32_1 = arith.constant 0 : i32
    return %c0_i32, %c0_i32_0 : i32, i32
  }
  func.func @transform_5(%arg0: i32) -> (i32, i32) {
    %c0_i32 = arith.constant 0 : i32
    %c0_i32_0 = arith.constant 0 : i32
    return %arg0, %c0_i32 : i32, i32
  }
}

</mosaic_0001>

<llo_original>
// kernel: mlp_forward.1
$region0: #{mlp_forward.1}
  #allocation0 [shape = 'u32[]', space=smem, size = 0x4, offset = 0x4, fixed_abs, tag = 'smem constant byte address 0x4 - core index']
  #allocation1 [shape = 'u32[144,128]{1,0:T(1,128)}', space=vmem, size = 0x12000, scoped, tag = 'internal scratch']
  #allocation2 [shape = 'f32[1,1]{1,0:T(1,128)S(6)}', space=smem, size = 0x200, scoped, tag = 'scoped memory for mlp_forward.1']
  %s0 = inlined_call_operand.vmem [shape: f32[128,128], index: 0, kind: input, shape index: {}]
  %s1 = inlined_call_operand.vmem [shape: f32[128,64], index: 1, kind: input, shape index: {}]
  %s2 = inlined_call_operand.vmem [shape: f32[1,64], index: 2, kind: input, shape index: {}]
  %s3 = inlined_call_operand.vmem [shape: f32[1,64], index: 3, kind: input, shape index: {}]
  %s4 = inlined_call_operand.<no memory space> [shape: f32[1,1], index: 4, kind: input, shape index: {}]
  %s5 = inlined_call_operand.vmem [shape: f32[1,128], index: 5, kind: output, shape index: {}]
  %s6 = sld [smem:[#allocation0]]
  $region30: #{mlp_forward.1} parent=0
    _
  %s8 = ssub.s32 1, %s6
  %s9 = scalar_select 0, %s8, %s6
  %10 = sst [smem:[#allocation2]] %s4
  // Predicated region
  $region2: #{mlp_forward.1} parent=0 // pred_check
    _
  $region3: #{mlp_forward.1} parent=0 // pred_check_branch
    %12 = sbr.rel (0) target = $region5
  $region4: #{mlp_forward.1} parent=0 // pred_region
    _
  $region5: #{mlp_forward.1} parent=0 // pred_fallthru
    _
  // Predicated region
  $region6: #{mlp_forward.1} parent=0 // pred_check
    _
  $region7: #{mlp_forward.1} parent=0 // pred_check_branch
    %14 = sbr.rel (0) target = $region9
  $region8: #{mlp_forward.1} parent=0 // pred_region
    _
  $region9: #{mlp_forward.1} parent=0 // pred_fallthru
    _
  // Predicated region
  $region10: #{mlp_forward.1} parent=0 // pred_check
    _
  $region11: #{mlp_forward.1} parent=0 // pred_check_branch
    %16 = sbr.rel (0) target = $region13
  $region12: #{mlp_forward.1} parent=0 // pred_region
    _
  $region13: #{mlp_forward.1} parent=0 // pred_fallthru
    _
  // Predicated region
  $region14: #{mlp_forward.1} parent=0 // pred_check
    _
  $region15: #{mlp_forward.1} parent=0 // pred_check_branch
    %18 = sbr.rel (0) target = $region17
  $region16: #{mlp_forward.1} parent=0 // pred_region
    _
  $region17: #{mlp_forward.1} parent=0 // pred_fallthru
    _
  // Predicated region
  $region18: #{mlp_forward.1} parent=0 // pred_check
    _
  $region19: #{mlp_forward.1} parent=0 // pred_check_branch
    %20 = sbr.rel (0) target = $region21
  $region20: #{mlp_forward.1} parent=0 // pred_region
    _
  $region21: #{mlp_forward.1} parent=0 // pred_fallthru
    _
  %v21 = vld [vmem:[%s0] sm:$0xff]
  %v22 = vld [vmem:[%s0 + $0x8] sm:$0xff]
  %v23 = vld [vmem:[%s0 + $0x10] sm:$0xff]
  %v24 = vld [vmem:[%s0 + $0x18] sm:$0xff]
  %v25 = vld [vmem:[%s0 + $0x20] sm:$0xff]
  %v26 = vld [vmem:[%s0 + $0x28] sm:$0xff]
  %v27 = vld [vmem:[%s0 + $0x30] sm:$0xff]
  %v28 = vld [vmem:[%s0 + $0x38] sm:$0xff]
  %v29 = vld [vmem:[%s0 + $0x40] sm:$0xff]
  %v30 = vld [vmem:[%s0 + $0x48] sm:$0xff]
  %v31 = vld [vmem:[%s0 + $0x50] sm:$0xff]
  %v32 = vld [vmem:[%s0 + $0x58] sm:$0xff]
  %v33 = vld [vmem:[%s0 + $0x60] sm:$0xff]
  %v34 = vld [vmem:[%s0 + $0x68] sm:$0xff]
  %v35 = vld [vmem:[%s0 + $0x70] sm:$0xff]
  %v36 = vld [vmem:[%s0 + $0x78] sm:$0xff]
  %v37 = vld [vmem:[%s1] sm:$0xff]
  %v38 = vld [vmem:[%s1 + $0x8] sm:$0xff]
  %v39 = vld [vmem:[%s1 + $0x10] sm:$0xff]
  %v40 = vld [vmem:[%s1 + $0x18] sm:$0xff]
  %v41 = vld [vmem:[%s1 + $0x20] sm:$0xff]
  %v42 = vld [vmem:[%s1 + $0x28] sm:$0xff]
  %v43 = vld [vmem:[%s1 + $0x30] sm:$0xff]
  %v44 = vld [vmem:[%s1 + $0x38] sm:$0xff]
  %v45 = vld [vmem:[%s1 + $0x40] sm:$0xff]
  %v46 = vld [vmem:[%s1 + $0x48] sm:$0xff]
  %v47 = vld [vmem:[%s1 + $0x50] sm:$0xff]
  %v48 = vld [vmem:[%s1 + $0x58] sm:$0xff]
  %v49 = vld [vmem:[%s1 + $0x60] sm:$0xff]
  %v50 = vld [vmem:[%s1 + $0x68] sm:$0xff]
  %v51 = vld [vmem:[%s1 + $0x70] sm:$0xff]
  %v52 = vld [vmem:[%s1 + $0x78] sm:$0xff]
  %v53 = vld [vmem:[%s2] sm:$0x1]
  %v55 = vlaneseq
  %v56 = vshrl.u32 %v55, 7
  %v57 = vsub.s32 0, %v56
  %v58 = vrot.slane %v53, %v57
  %60 = vmatprep.subr.mxu0 0.0
  %61 = vmatpush1.msra.mxu0 %v37
  %62 = vmatprep.subr.mxu0 0.0
  %63 = vmatpush1.msra.mxu0 %v38
  %64 = vmatprep.subr.mxu0 0.0
  %65 = vmatpush1.msra.mxu0 %v39
  %66 = vmatprep.subr.mxu0 0.0
  %67 = vmatpush1.msra.mxu0 %v40
  %68 = vmatprep.subr.mxu0 0.0
  %69 = vmatpush1.msra.mxu0 %v41
  %70 = vmatprep.subr.mxu0 0.0
  %71 = vmatpush1.msra.mxu0 %v42
  %72 = vmatprep.subr.mxu0 0.0
  %73 = vmatpush1.msra.mxu0 %v43
  %74 = vmatprep.subr.mxu0 0.0
  %75 = vmatpush1.msra.mxu0 %v44
  %76 = vmatprep.subr.mxu0 0.0
  %77 = vmatpush1.msra.mxu0 %v45
  %78 = vmatprep.subr.mxu0 0.0
  %79 = vmatpush1.msra.mxu0 %v46
  %80 = vmatprep.subr.mxu0 0.0
  %81 = vmatpush1.msra.mxu0 %v47
  %82 = vmatprep.subr.mxu0 0.0
  %83 = vmatpush1.msra.mxu0 %v48
  %84 = vmatprep.subr.mxu0 0.0
  %85 = vmatpush1.msra.mxu0 %v49
  %86 = vmatprep.subr.mxu0 0.0
  %87 = vmatpush1.msra.mxu0 %v50
  %88 = vmatprep.subr.mxu0 0.0
  %89 = vmatpush1.msra.mxu0 %v51
  %90 = vmatprep.subr.mxu0 0.0
  %91 = vmatpush1.msra.mxu0 %v52
  %92 = vmatprep.subr.mxu0 0.0
  %93 = vmatpush1.msra.mxu0 0.0
  %94 = vmatprep.subr.mxu0 0.0
  %95 = vmatpush1.msra.mxu0 0.0
  %96 = vmatprep.subr.mxu0 0.0
  %97 = vmatpush1.msra.mxu0 0.0
  %98 = vmatprep.subr.mxu0 0.0
  %99 = vmatpush1.msra.mxu0 0.0
  %100 = vmatprep.subr.mxu0 0.0
  %101 = vmatpush1.msra.mxu0 0.0
  %102 = vmatprep.subr.mxu0 0.0
  %103 = vmatpush1.msra.mxu0 0.0
  %104 = vmatprep.subr.mxu0 0.0
  %105 = vmatpush1.msra.mxu0 0.0
  %106 = vmatprep.subr.mxu0 0.0
  %107 = vmatpush1.msra.mxu0 0.0
  %108 = vmatprep.subr.mxu0 0.0
  %109 = vmatpush1.msra.mxu0 0.0
  %110 = vmatprep.subr.mxu0 0.0
  %111 = vmatpush1.msra.mxu0 0.0
  %112 = vmatprep.subr.mxu0 0.0
  %113 = vmatpush1.msra.mxu0 0.0
  %114 = vmatprep.subr.mxu0 0.0
  %115 = vmatpush1.msra.mxu0 0.0
  %116 = vmatprep.subr.mxu0 0.0
  %117 = vmatpush1.msra.mxu0 0.0
  %118 = vmatprep.subr.mxu0 0.0
  %119 = vmatpush1.msra.mxu0 0.0
  %120 = vmatprep.subr.mxu0 0.0
  %121 = vmatpush1.msra.mxu0 0.0
  %122 = vmatprep.subr.mxu0 0.0
  %123 = vmatpush1.msra.mxu0 0.0
  %124 = vmatprep.mubr.f32.mxu0 0.0
  %125 = vmatmul.mubr.f32.gmra.mrb[0].mxu0 %v21
  %v126 = vpop.f32.mrb[0].mxu0
  %v127 = vadd.f32 %v58, %v126
  %v128 = vpop.f32.mrb[0].mxu0
  %129 = vmatprep.mubr.f32.mxu0 0.0
  %130 = vmatmul.mubr.f32.gmra.mrb[0].mxu0 %v22
  %v131 = vpop.f32.mrb[0].mxu0
  %v132 = vadd.f32 %v58, %v131
  %v133 = vpop.f32.mrb[0].mxu0
  %134 = vmatprep.mubr.f32.mxu0 0.0
  %135 = vmatmul.mubr.f32.gmra.mrb[0].mxu0 %v23
  %v136 = vpop.f32.mrb[0].mxu0
  %v137 = vadd.f32 %v58, %v136
  %v138 = vpop.f32.mrb[0].mxu0
  %139 = vmatprep.mubr.f32.mxu0 0.0
  %140 = vmatmul.mubr.f32.gmra.mrb[0].mxu0 %v24
  %v141 = vpop.f32.mrb[0].mxu0
  %v142 = vadd.f32 %v58, %v141
  %v143 = vpop.f32.mrb[0].mxu0
  %144 = vmatprep.mubr.f32.mxu0 0.0
  %145 = vmatmul.mubr.f32.gmra.mrb[0].mxu0 %v25
  %v146 = vpop.f32.mrb[0].mxu0
  %v147 = vadd.f32 %v58, %v146
  %v148 = vpop.f32.mrb[0].mxu0
  %149 = vmatprep.mubr.f32.mxu0 0.0
  %150 = vmatmul.mubr.f32.gmra.mrb[0].mxu0 %v26
  %v151 = vpop.f32.mrb[0].mxu0
  %v152 = vadd.f32 %v58, %v151
  %v153 = vpop.f32.mrb[0].mxu0
  %154 = vmatprep.mubr.f32.mxu0 0.0
  %155 = vmatmul.mubr.f32.gmra.mrb[0].mxu0 %v27
  %v156 = vpop.f32.mrb[0].mxu0
  %v157 = vadd.f32 %v58, %v156
  %v158 = vpop.f32.mrb[0].mxu0
  %159 = vmatprep.mubr.f32.mxu0 0.0
  %160 = vmatmul.mubr.f32.gmra.mrb[0].mxu0 %v28
  %v161 = vpop.f32.mrb[0].mxu0
  %v162 = vadd.f32 %v58, %v161
  %v163 = vpop.f32.mrb[0].mxu0
  %164 = vmatprep.mubr.f32.mxu0 0.0
  %165 = vmatmul.mubr.f32.gmra.mrb[0].mxu0 %v29
  %v166 = vpop.f32.mrb[0].mxu0
  %v167 = vadd.f32 %v58, %v166
  %v168 = vpop.f32.mrb[0].mxu0
  %169 = vmatprep.mubr.f32.mxu0 0.0
  %170 = vmatmul.mubr.f32.gmra.mrb[0].mxu0 %v30
  %v171 = vpop.f32.mrb[0].mxu0
  %v172 = vadd.f32 %v58, %v171
  %v173 = vpop.f32.mrb[0].mxu0
  %174 = vmatprep.mubr.f32.mxu0 0.0
  %175 = vmatmul.mubr.f32.gmra.mrb[0].mxu0 %v31
  %v176 = vpop.f32.mrb[0].mxu0
  %v177 = vadd.f32 %v58, %v176
  %v178 = vpop.f32.mrb[0].mxu0
  %179 = vmatprep.mubr.f32.mxu0 0.0
  %180 = vmatmul.mubr.f32.gmra.mrb[0].mxu0 %v32
  %v181 = vpop.f32.mrb[0].mxu0
  %v182 = vadd.f32 %v58, %v181
  %v183 = vpop.f32.mrb[0].mxu0
  %184 = vmatprep.mubr.f32.mxu0 0.0
  %185 = vmatmul.mubr.f32.gmra.mrb[0].mxu0 %v33
  %v186 = vpop.f32.mrb[0].mxu0
  %v187 = vadd.f32 %v58, %v186
  %v188 = vpop.f32.mrb[0].mxu0
  %189 = vmatprep.mubr.f32.mxu0 0.0
  %190 = vmatmul.mubr.f32.gmra.mrb[0].mxu0 %v34
  %v191 = vpop.f32.mrb[0].mxu0
  %v192 = vadd.f32 %v58, %v191
  %v193 = vpop.f32.mrb[0].mxu0
  %194 = vmatprep.mubr.f32.mxu0 0.0
  %195 = vmatmul.mubr.f32.gmra.mrb[0].mxu0 %v35
  %v196 = vpop.f32.mrb[0].mxu0
  %v197 = vadd.f32 %v58, %v196
  %v198 = vpop.f32.mrb[0].mxu0
  %199 = vmatprep.mubr.f32.mxu0 0.0
  %200 = vmatmul.mubr.f32.gmra.mrb[0].mxu0 %v36
  %v201 = vpop.f32.mrb[0].mxu0
  %v202 = vadd.f32 %v58, %v201
  %v203 = vpop.f32.mrb[0].mxu0
  %204 = vdwg.mxu0
  %v205 = vmax.f32 %v127, 0.0
  %v206 = vmax.f32 %v132, 0.0
  %v207 = vmax.f32 %v137, 0.0
  %v208 = vmax.f32 %v142, 0.0
  %v209 = vmax.f32 %v147, 0.0
  %v210 = vmax.f32 %v152, 0.0
  %v211 = vmax.f32 %v157, 0.0
  %v212 = vmax.f32 %v162, 0.0
  %v213 = vmax.f32 %v167, 0.0
  %v214 = vmax.f32 %v172, 0.0
  %v215 = vmax.f32 %v177, 0.0
  %v216 = vmax.f32 %v182, 0.0
  %v217 = vmax.f32 %v187, 0.0
  %v218 = vmax.f32 %v192, 0.0
  %v219 = vmax.f32 %v197, 0.0
  %v220 = vmax.f32 %v202, 0.0
  %v221 = vld [vmem:[%s3] sm:$0x1]
  %v223 = vlaneseq
  %v224 = vshrl.u32 %v223, 7
  %v225 = vsub.s32 0, %v224
  %v226 = vrot.slane %v221, %v225
  %v228 = vmul.f32 %v205, %v226
  %v229 = vmul.f32 %v206, %v226
  %v230 = vmul.f32 %v207, %v226
  %v231 = vmul.f32 %v208, %v226
  %v232 = vmul.f32 %v209, %v226
  %v233 = vmul.f32 %v210, %v226
  %v234 = vmul.f32 %v211, %v226
  %v235 = vmul.f32 %v212, %v226
  %v236 = vmul.f32 %v213, %v226
  %v237 = vmul.f32 %v214, %v226
  %v238 = vmul.f32 %v215, %v226
  %v239 = vmul.f32 %v216, %v226
  %v240 = vmul.f32 %v217, %v226
  %v241 = vmul.f32 %v218, %v226
  %v242 = vmul.f32 %v219, %v226
  %v243 = vmul.f32 %v220, %v226
  %vm244 = vcmask 523264
  %v245 = vsel %vm244, %v228, 0.0
  %246 = vadd.xlane.f32.xlu0 %v245
  %v247 = vpop.xlane.xlu0 %246
  %v248 = vsel %vm244, %v229, 0.0
  %249 = vadd.xlane.f32.xlu0 %v248
  %v250 = vpop.xlane.xlu0 %249
  %v251 = vsel %vm244, %v230, 0.0
  %252 = vadd.xlane.f32.xlu0 %v251
  %v253 = vpop.xlane.xlu0 %252
  %v254 = vsel %vm244, %v231, 0.0
  %255 = vadd.xlane.f32.xlu0 %v254
  %v256 = vpop.xlane.xlu0 %255
  %v257 = vsel %vm244, %v232, 0.0
  %258 = vadd.xlane.f32.xlu0 %v257
  %v259 = vpop.xlane.xlu0 %258
  %v260 = vsel %vm244, %v233, 0.0
  %261 = vadd.xlane.f32.xlu0 %v260
  %v262 = vpop.xlane.xlu0 %261
  %v263 = vsel %vm244, %v234, 0.0
  %264 = vadd.xlane.f32.xlu0 %v263
  %v265 = vpop.xlane.xlu0 %264
  %v266 = vsel %vm244, %v235, 0.0
  %267 = vadd.xlane.f32.xlu0 %v266
  %v268 = vpop.xlane.xlu0 %267
  %v269 = vsel %vm244, %v236, 0.0
  %270 = vadd.xlane.f32.xlu0 %v269
  %v271 = vpop.xlane.xlu0 %270
  %v272 = vsel %vm244, %v237, 0.0
  %273 = vadd.xlane.f32.xlu0 %v272
  %v274 = vpop.xlane.xlu0 %273
  %v275 = vsel %vm244, %v238, 0.0
  %276 = vadd.xlane.f32.xlu0 %v275
  %v277 = vpop.xlane.xlu0 %276
  %v278 = vsel %vm244, %v239, 0.0
  %279 = vadd.xlane.f32.xlu0 %v278
  %v280 = vpop.xlane.xlu0 %279
  %v281 = vsel %vm244, %v240, 0.0
  %282 = vadd.xlane.f32.xlu0 %v281
  %v283 = vpop.xlane.xlu0 %282
  %v284 = vsel %vm244, %v241, 0.0
  %285 = vadd.xlane.f32.xlu0 %v284
  %v286 = vpop.xlane.xlu0 %285
  %v287 = vsel %vm244, %v242, 0.0
  %288 = vadd.xlane.f32.xlu0 %v287
  %v289 = vpop.xlane.xlu0 %288
  %v290 = vsel %vm244, %v243, 0.0
  %291 = vadd.xlane.f32.xlu0 %v290
  %v292 = vpop.xlane.xlu0 %291
  %s293 = sld [smem:[#allocation2]]
  %v294 = vstv %s293
  %v295 = vadd.f32 %v247, %v294
  %v296 = vadd.f32 %v250, %v294
  %v297 = vadd.f32 %v253, %v294
  %v298 = vadd.f32 %v256, %v294
  %v299 = vadd.f32 %v259, %v294
  %v300 = vadd.f32 %v262, %v294
  %v301 = vadd.f32 %v265, %v294
  %v302 = vadd.f32 %v268, %v294
  %v303 = vadd.f32 %v271, %v294
  %v304 = vadd.f32 %v274, %v294
  %v305 = vadd.f32 %v277, %v294
  %v306 = vadd.f32 %v280, %v294
  %v307 = vadd.f32 %v283, %v294
  %v308 = vadd.f32 %v286, %v294
  %v309 = vadd.f32 %v289, %v294
  %v310 = vadd.f32 %v292, %v294
  %v327 = vlaneseq
  %v328 = vand.u32 %v327, 127
  %v329 = vlaneseq
  %v330 = vshrl.u32 %v329, 7
  %v331 = vsub.s32 %v328, %v330
  %v332 = vrot.slane %v295, %v331
  %v333 = vadd.s32 %v328, 4294967288
  %v334 = vlaneseq
  %v335 = vshrl.u32 %v334, 7
  %v336 = vsub.s32 %v333, %v335
  %v337 = vrot.slane %v296, %v336
  %vm338 = vcmask 130112
  %v339 = vsel %vm338, %v337, %v332
  %v340 = vadd.s32 %v328, 4294967280
  %v341 = vlaneseq
  %v342 = vshrl.u32 %v341, 7
  %v343 = vsub.s32 %v340, %v342
  %v344 = vrot.slane %v297, %v343
  %vm345 = vcmask 195712
  %v346 = vsel %vm345, %v344, %v339
  %v347 = vadd.s32 %v328, 4294967272
  %v348 = vlaneseq
  %v349 = vshrl.u32 %v348, 7
  %v350 = vsub.s32 %v347, %v349
  %v351 = vrot.slane %v298, %v350
  %vm352 = vcmask 261312
  %v353 = vsel %vm352, %v351, %v346
  %v354 = vadd.s32 %v328, 4294967264
  %v355 = vlaneseq
  %v356 = vshrl.u32 %v355, 7
  %v357 = vsub.s32 %v354, %v356
  %v358 = vrot.slane %v299, %v357
  %vm359 = vcmask 326912
  %v360 = vsel %vm359, %v358, %v353
  %v361 = vadd.s32 %v328, 4294967256
  %v362 = vlaneseq
  %v363 = vshrl.u32 %v362, 7
  %v364 = vsub.s32 %v361, %v363
  %v365 = vrot.slane %v300, %v364
  %vm366 = vcmask 392512
  %v367 = vsel %vm366, %v365, %v360
  %v368 = vadd.s32 %v328, 4294967248
  %v369 = vlaneseq
  %v370 = vshrl.u32 %v369, 7
  %v371 = vsub.s32 %v368, %v370
  %v372 = vrot.slane %v301, %v371
  %vm373 = vcmask 458112
  %v374 = vsel %vm373, %v372, %v367
  %v375 = vadd.s32 %v328, 4294967240
  %v376 = vlaneseq
  %v377 = vshrl.u32 %v376, 7
  %v378 = vsub.s32 %v375, %v377
  %v379 = vrot.slane %v302, %v378
  %vm380 = vcmask 523712
  %v381 = vsel %vm380, %v379, %v374
  %v382 = vadd.s32 %v328, 4294967232
  %v383 = vlaneseq
  %v384 = vshrl.u32 %v383, 7
  %v385 = vsub.s32 %v382, %v384
  %v386 = vrot.slane %v303, %v385
  %vm387 = vcmask 589312
  %v388 = vsel %vm387, %v386, %v381
  %v389 = vadd.s32 %v328, 4294967224
  %v390 = vlaneseq
  %v391 = vshrl.u32 %v390, 7
  %v392 = vsub.s32 %v389, %v391
  %v393 = vrot.slane %v304, %v392
  %vm394 = vcmask 654912
  %v395 = vsel %vm394, %v393, %v388
  %v396 = vadd.s32 %v328, 4294967216
  %v397 = vlaneseq
  %v398 = vshrl.u32 %v397, 7
  %v399 = vsub.s32 %v396, %v398
  %v400 = vrot.slane %v305, %v399
  %vm401 = vcmask 720512
  %v402 = vsel %vm401, %v400, %v395
  %v403 = vadd.s32 %v328, 4294967208
  %v404 = vlaneseq
  %v405 = vshrl.u32 %v404, 7
  %v406 = vsub.s32 %v403, %v405
  %v407 = vrot.slane %v306, %v406
  %vm408 = vcmask 786112
  %v409 = vsel %vm408, %v407, %v402
  %v410 = vadd.s32 %v328, 4294967200
  %v411 = vlaneseq
  %v412 = vshrl.u32 %v411, 7
  %v413 = vsub.s32 %v410, %v412
  %v414 = vrot.slane %v307, %v413
  %vm415 = vcmask 851712
  %v416 = vsel %vm415, %v414, %v409
  %v417 = vadd.s32 %v328, 4294967192
  %v418 = vlaneseq
  %v419 = vshrl.u32 %v418, 7
  %v420 = vsub.s32 %v417, %v419
  %v421 = vrot.slane %v308, %v420
  %vm422 = vcmask 917312
  %v423 = vsel %vm422, %v421, %v416
  %v424 = vadd.s32 %v328, 4294967184
  %v425 = vlaneseq
  %v426 = vshrl.u32 %v425, 7
  %v427 = vsub.s32 %v424, %v426
  %v428 = vrot.slane %v309, %v427
  %vm429 = vcmask 982912
  %v430 = vsel %vm429, %v428, %v423
  %v431 = vadd.s32 %v328, 4294967176
  %v432 = vlaneseq
  %v433 = vshrl.u32 %v432, 7
  %v434 = vsub.s32 %v431, %v433
  %v435 = vrot.slane %v310, %v434
  %vm436 = vcmask 1048512
  %v437 = vsel %vm436, %v435, %v430
  %439 = vst [vmem:[%s5] sm:$0x1] %v437
  // Predicated region
  $region22: #{mlp_forward.1} parent=0 // pred_check
    _
  $region23: #{mlp_forward.1} parent=0 // pred_check_branch
    %441 = sbr.rel (0) target = $region25
  $region24: #{mlp_forward.1} parent=0 // pred_region
    _
  $region25: #{mlp_forward.1} parent=0 // pred_fallthru
    _
  // Predicated region
  $region26: #{mlp_forward.1} parent=0 // pred_check
    _
  $region27: #{mlp_forward.1} parent=0 // pred_check_branch
    %443 = sbr.rel (0) target = $region29
  $region28: #{mlp_forward.1} parent=0 // pred_region
    _
  $region29: #{mlp_forward.1} parent=0 // pred_fallthru
    _

</llo_original>
